<compile_context>
chip_gen: v7x
topology: tpu7x:2x2x1
jax: 0.10.0
libtpu: 0.0.40
codegen_flags: <defaults>
</compile_context>

<pallas_src>
import jax
import jax.numpy as jnp
from jax import lax
from jax.experimental import pallas as pl
from jax.experimental.pallas import tpu as pltpu


def conv_bn_leaky_kernel(x_ref, b_ref, ss_ref, o_ref):
    # x_ref:  (Hp_pad, W*Cin_p)        bf16 input, H-halo padded, (W, Cin_p) on lanes
    # b_ref:  (KH*W*Cin_p, W*Cout)     bf16 banded weights, taps stacked along K
    # ss_ref: (2, W*Cout)              f32: row 0 = BN scale, row 1 = BN shift (W-tiled)
    # o_ref:  (H, W*Cout)              lane-dense f32 output (last dim multiple of 128)
    h, wcout = o_ref.shape
    k_lanes = x_ref.shape[1]                    # W * Cin_p (lane-dense, 128)
    kh_taps = b_ref.shape[0] // k_lanes

    # Fused LHS: KH H-shifted ref slices concatenated along lanes -> (H, KH*W*Cin_p).
    lhs = jnp.concatenate(
        [x_ref[pl.ds(kh, h), :] for kh in range(kh_taps)], axis=-1)

    # Single MXU matmul, f32 accumulation.
    acc = jnp.dot(lhs, b_ref[...], preferred_element_type=jnp.float32)

    # Fused BatchNorm (eval) + LeakyReLU(0.1) epilogue in f32.
    y = acc * ss_ref[0:1, :] + ss_ref[1:2, :]
    o_ref[...] = jnp.maximum(y, 0.1 * y).astype(o_ref.dtype)


def fold_conv_bn_params(weight_oihw, scale, shift, W, cin_pad):
    """Weight-load-time precompute: banded conv matrix + merged BN affine.

    band[kh*W*Cin_p + w'*Cin_p + ci, w*Cout + co] = weight[co, ci, kh, kw]
    with kw = w' - w + pad_w (zero outside the band => implicit W 'same' padding).
    """
    Cout, Cin, KH, KW = weight_oihw.shape
    pad_w = KW // 2
    w_hwio = jnp.transpose(weight_oihw, (2, 3, 1, 0))             # (KH, KW, Cin, Cout)
    w_hwio = jnp.pad(w_hwio, ((0, 0), (0, 0), (0, cin_pad - Cin), (0, 0)))
    a_idx = jnp.arange(W)[None, :, None]                          # w' (input col)
    b_idx = jnp.arange(W)[None, None, :]                          # w  (output col)
    t_idx = jnp.arange(KW)[:, None, None]                         # kw tap
    sel = (a_idx == b_idx + t_idx - pad_w).astype(w_hwio.dtype)   # (KW, W, W)
    band = jnp.einsum("tab,htio->haibo", sel, w_hwio)             # (KH, W, Cin_p, W, Cout)
    band = band.reshape(KH * W * cin_pad, W * Cout).astype(jnp.bfloat16)

    ss = jnp.stack([jnp.tile(scale.astype(jnp.float32), W),
                    jnp.tile(shift.astype(jnp.float32), W)], axis=0)  # (2, W*Cout)
    return band, ss


def conv_bn_leaky(x_nchw, band, ss, *, kh, cin_pad):
    N, Cin, H, W = x_nchw.shape
    WCout = ss.shape[1]
    Cout = WCout // W
    pad_h = kh // 2                                # 'same' padding along H
    Hp = H + 2 * pad_h
    Hp_pad = ((Hp + 15) // 16) * 16                # bf16 sublane-pack alignment

    # Per-call input layout: NCHW -> (N, Hp_pad, W*Cin_p), lane-dense, bf16.
    x_nhwc = jnp.transpose(x_nchw, (0, 2, 3, 1))                       # (N, H, W, Cin)
    x_nhwc = jnp.pad(x_nhwc, ((0, 0), (0, 0), (0, 0), (0, cin_pad - Cin)))
    x_flat = x_nhwc.reshape(N, H, W * cin_pad)
    x_flat = jnp.pad(x_flat, ((0, 0), (pad_h, Hp_pad - Hp + pad_h), (0, 0)))
    x_flat = x_flat.astype(jnp.bfloat16)

    grid = (N,)   # >= 2 parallel steps: feeds both v7x TCs + enables pipelining

    out = pl.pallas_call(
        conv_bn_leaky_kernel,
        out_shape=jax.ShapeDtypeStruct((N, H, WCout), jnp.float32),
        grid=grid,
        in_specs=[
            pl.BlockSpec((None, Hp_pad, W * cin_pad), lambda i: (i, 0, 0)),
            pl.BlockSpec((kh * W * cin_pad, WCout), lambda i: (0, 0)),
            pl.BlockSpec((2, WCout), lambda i: (0, 0)),
        ],
        out_specs=pl.BlockSpec((None, H, WCout), lambda i: (i, 0, 0)),
        compiler_params=pltpu.CompilerParams(
            dimension_semantics=("parallel",),
            vmem_limit_bytes=32 * 1024 * 1024,
        ),
    )(x_flat, band, ss)

    out = out.reshape(N, H, W, Cout)               # lane-dense store; free reshape
    return jnp.transpose(out, (0, 3, 1, 2))        # back to NCHW


def reference(x_nchw, weight_oihw, scale, shift):
    # Pure-JAX reference: conv2d (NCHW) -> folded BN -> LeakyReLU(0.1), true f32.
    y = lax.conv_general_dilated(
        x_nchw, weight_oihw, window_strides=(1, 1), padding=((1, 1), (1, 1)),
        dimension_numbers=("NCHW", "OIHW", "NCHW"),
        precision=lax.Precision.HIGHEST)
    y = y * scale[None, :, None, None] + shift[None, :, None, None]
    return jnp.where(y > 0, y, 0.1 * y)


if __name__ == "__main__":
    key = jax.random.PRNGKey(0)
    k_x, k_w, k_g, k_b, k_m, k_v = jax.random.split(key, 6)

    N, Cin, H, W = 2, 4, 16, 16
    Cout, K = 8, 3
    eps = 1e-5

    x = jax.random.normal(k_x, (N, Cin, H, W), jnp.float32)
    weight = jax.random.normal(k_w, (Cout, Cin, K, K), jnp.float32) * 0.1
    gamma = 1.0 + 0.1 * jax.random.normal(k_g, (Cout,), jnp.float32)
    beta = 0.1 * jax.random.normal(k_b, (Cout,), jnp.float32)
    running_mean = 0.05 * jax.random.normal(k_m, (Cout,), jnp.float32)
    running_var = 0.5 + jnp.abs(jax.random.normal(k_v, (Cout,), jnp.float32)) * 0.5

    # Fold eval-mode BatchNorm into a per-channel affine.
    # TODO(synk): training-mode BN (batch statistics) is not modeled; eval-mode
    # running-stats semantics are used, as is standard for kernel inference.
    scale = gamma / jnp.sqrt(running_var + eps)
    shift = beta - running_mean * scale

    # Weight-load-time precompute (hoisted out of the per-call path).
    CIN_PAD = 8                                   # so W*Cin_p = 128 (lane-dense x)
    band, ss = fold_conv_bn_params(weight, scale, shift, W, CIN_PAD)
    band, ss = jax.block_until_ready((band, ss))

    out = conv_bn_leaky(x, band, ss, kh=K, cin_pad=CIN_PAD)
    out = jax.block_until_ready(out)
    assert out.shape == (N, Cout, H, W)

    # Tight check vs. a reference fed the same bf16-rounded inputs (kernel logic),
    # and a looser check vs. the full-f32 reference (bf16 quantization error only).
    ref_bf16 = reference(
        x.astype(jnp.bfloat16).astype(jnp.float32),
        weight.astype(jnp.bfloat16).astype(jnp.float32), scale, shift)
    ref_f32 = reference(x, weight, scale, shift)
    assert jnp.allclose(out, ref_bf16, atol=2e-3, rtol=2e-3)
    assert jnp.allclose(out, ref_f32, atol=5e-2, rtol=5e-2)

    print("KERNEL_OK")
</pallas_src>

<mosaic_0001>
module attributes {stable_mosaic.version = 11 : i64} {
  func.func @conv_bn_leaky_kernel(%arg0: i32, %arg1: memref<1x32x128xbf16, #tpu.memory_space<vmem>>, %arg2: memref<384x128xbf16, #tpu.memory_space<vmem>>, %arg3: memref<2x128xf32, #tpu.memory_space<vmem>>, %arg4: memref<1x16x128xf32, #tpu.memory_space<vmem>>) attributes {dimension_semantics = [#tpu.dimension_semantics<parallel>], iteration_bounds = array<i64: 2>, scalar_prefetch = 0 : i64, scratch_operands = 0 : i64, tpu.core_type = #tpu.core_type<tc>, window_params = [{transform_indices = @transform_0, window_bounds = array<i64: 1, 32, 128>}, {pipeline_mode = #tpu.pipeline_mode<synchronous>, transform_indices = @transform_1, window_bounds = array<i64: 384, 128>}, {pipeline_mode = #tpu.pipeline_mode<synchronous>, transform_indices = @transform_2, window_bounds = array<i64: 2, 128>}, {transform_indices = @transform_3, window_bounds = array<i64: 1, 16, 128>}]} {
    %c0 = arith.constant 0 : index
    %c0_0 = arith.constant 0 : index
    %c0_1 = arith.constant 0 : index
    %0 = vector.load %arg1[%c0, %c0_0, %c0_1] : memref<1x32x128xbf16, #tpu.memory_space<vmem>>, vector<1x16x128xbf16>
    %1 = vector.shape_cast %0 : vector<1x16x128xbf16> to vector<16x128xbf16>
    %c0_2 = arith.constant 0 : index
    %c1 = arith.constant 1 : index
    %c0_3 = arith.constant 0 : index
    %2 = vector.load %arg1[%c0_2, %c1, %c0_3] : memref<1x32x128xbf16, #tpu.memory_space<vmem>>, vector<1x16x128xbf16>
    %3 = vector.shape_cast %2 : vector<1x16x128xbf16> to vector<16x128xbf16>
    %c0_4 = arith.constant 0 : index
    %c2 = arith.constant 2 : index
    %c0_5 = arith.constant 0 : index
    %4 = vector.load %arg1[%c0_4, %c2, %c0_5] : memref<1x32x128xbf16, #tpu.memory_space<vmem>>, vector<1x16x128xbf16>
    %5 = vector.shape_cast %4 : vector<1x16x128xbf16> to vector<16x128xbf16>
    %6 = tpu.concatenate %1, %3, %5 in 1 : vector<16x128xbf16>, vector<16x128xbf16>, vector<16x128xbf16> -> vector<16x384xbf16>
    %c0_6 = arith.constant 0 : index
    %c0_7 = arith.constant 0 : index
    %7 = vector.load %arg2[%c0_6, %c0_7] : memref<384x128xbf16, #tpu.memory_space<vmem>>, vector<384x128xbf16>
    %cst = arith.constant dense<0.000000e+00> : vector<16x128xf32>
    %8 = tpu.matmul %6, %7, %cst {dimension_numbers = #tpu.dot_dimension_numbers<[1], [0], [0], [1], [0, 0, 1, 1], [], []>} : vector<16x384xbf16>, vector<384x128xbf16>, vector<16x128xf32> -> vector<16x128xf32>
    %c0_8 = arith.constant 0 : index
    %c0_9 = arith.constant 0 : index
    %9 = vector.load %arg3[%c0_8, %c0_9] : memref<2x128xf32, #tpu.memory_space<vmem>>, vector<1x128xf32>
    %10 = vector.broadcast %9 : vector<1x128xf32> to vector<16x128xf32>
    %11 = arith.mulf %8, %10 : vector<16x128xf32>
    %c1_10 = arith.constant 1 : index
    %c0_11 = arith.constant 0 : index
    %12 = vector.load %arg3[%c1_10, %c0_11] : memref<2x128xf32, #tpu.memory_space<vmem>>, vector<1x128xf32>
    %13 = vector.broadcast %12 : vector<1x128xf32> to vector<16x128xf32>
    %14 = arith.addf %11, %13 : vector<16x128xf32>
    %cst_12 = arith.constant 1.000000e-01 : f32
    %15 = vector.broadcast %cst_12 : f32 to vector<16x128xf32>
    %16 = arith.mulf %15, %14 : vector<16x128xf32>
    %17 = arith.maximumf %14, %16 : vector<16x128xf32>
    %c0_13 = arith.constant 0 : index
    %c0_14 = arith.constant 0 : index
    %c0_15 = arith.constant 0 : index
    %18 = vector.load %arg4[%c0_13, %c0_14, %c0_15] : memref<1x16x128xf32, #tpu.memory_space<vmem>>, vector<1x16x128xf32>
    %19 = vector.shape_cast %18 : vector<1x16x128xf32> to vector<16x128xf32>
    %20 = vector.shape_cast %17 : vector<16x128xf32> to vector<1x16x128xf32>
    tpu.vector_store %arg4[%c0_13, %c0_14, %c0_15], %20 {strides = array<i32>} : memref<1x16x128xf32, #tpu.memory_space<vmem>>, vector<1x16x128xf32>,
    return
  }
  func.func @transform_0(%arg0: i32) -> (i32, i32, i32) {
    %c0_i32 = arith.constant 0 : i32
    %c0_i32_0 = arith.constant 0 : i32
    %c0_i32_1 = arith.constant 0 : i32
    return %arg0, %c0_i32, %c0_i32_0 : i32, i32, i32
  }
  func.func @transform_1(%arg0: i32) -> (i32, i32) {
    %c0_i32 = arith.constant 0 : i32
    %c0_i32_0 = arith.constant 0 : i32
    %c0_i32_1 = arith.constant 0 : i32
    return %c0_i32, %c0_i32_0 : i32, i32
  }
  func.func @transform_2(%arg0: i32) -> (i32, i32) {
    %c0_i32 = arith.constant 0 : i32
    %c0_i32_0 = arith.constant 0 : i32
    %c0_i32_1 = arith.constant 0 : i32
    return %c0_i32, %c0_i32_0 : i32, i32
  }
  func.func @transform_3(%arg0: i32) -> (i32, i32, i32) {
    %c0_i32 = arith.constant 0 : i32
    %c0_i32_0 = arith.constant 0 : i32
    %c0_i32_1 = arith.constant 0 : i32
    return %arg0, %c0_i32, %c0_i32_0 : i32, i32, i32
  }
}

</mosaic_0001>

<llo_original>
// kernel: tpu_custom_call.1
$region0: #{tpu_custom_call.1}
  #allocation0 [shape = 'u32[]', space=smem, size = 0x4, offset = 0x4, fixed_abs, tag = 'smem constant byte address 0x4 - core index']
  #allocation1 [shape = 'u32[144,128]{1,0:T(1,128)}', space=vmem, size = 0x12000, scoped, tag = 'internal scratch']
  %s0 = inlined_call_operand.hbm [shape: bf16[2,32,128], index: 0, kind: input, shape index: {}]
  %s1 = inlined_call_operand.hbm [shape: bf16[384,128], index: 1, kind: input, shape index: {}]
  %s2 = inlined_call_operand.vmem [shape: f32[2,128], index: 2, kind: input, shape index: {}]
  %s3 = inlined_call_operand.hbm [shape: f32[2,16,128], index: 3, kind: output, shape index: {}]
  %s4 = sld [smem:[#allocation0]]
  $region53: #{tpu_custom_call.1} parent=0
    _
  %s6 = ssub.s32 1, %s4
  %s7 = scalar_select 0, %s6, %s4
  $region1: #{tpu_custom_call.1} parent=0
    #allocation2 [shape = 'u8[16384]{0}', space=vmem, size = 0x4000, scoped, tag = 'input window, operand 0']
    #allocation3 [shape = 's32[2]{0}', space=sflag, size = 0x8, scoped, tag = 'scoped memory for tpu_custom_call.1']
    #allocation4 [shape = 's32[2]{0}', space=sflag, size = 0x8, scoped, tag = 'scoped memory for tpu_custom_call.1']
    #allocation5 [shape = 'u8[98304]{0}', space=vmem, size = 0x18000, scoped, tag = 'input window, operand 1, single buffered']
    #allocation6 [shape = 's32[1]{0}', space=sflag, size = 0x4, scoped, tag = 'scoped memory for tpu_custom_call.1']
    #allocation7 [shape = 'u8[16384]{0}', space=vmem, size = 0x4000, scoped, tag = 'output window, operand 0']
    %8 = vsyncpa [#allocation3], 0
    %s9 = scalar_lea.sflag [#allocation3], 1
    %10 = vsyncpa %s9, 0
    %11 = vsyncpa [#allocation6], 0
    %12 = vsyncpa [#allocation4], 0
    %s13 = scalar_lea.sflag [#allocation4], 1
    %14 = vsyncpa %s13, 0
    loop: start=0, step=1, limit=4
    $region2: #{tpu_custom_call.1} parent=1 // loop_pre_header
      _
    $region3: #{tpu_custom_call.1} parent=1 // loop_header
      %s16 = sphi 0, %s20
      %p17 = scmp.ge.s32.totalorder %s16, 4
      %s26 = sphi 0, %s28
      %s29 = sphi 0, %s26
      %s30 = sphi 0, %s29
      %s46 = sphi 0, %s30
      %s50 = sphi 0, %s50
      %s52 = sphi 0, %s50
      %s53 = sphi 0, %s52
      %s67 = sphi 0, %s53
      %s71 = sphi 0, %s71
      %s73 = sphi 0, %s71
      %s74 = sphi 0, %s73
      %s88 = sphi 0, %s74
      %s94 = sphi 0, %s96
      %s97 = sphi 0, %s94
      %s98 = sphi 0, %s97
      %s114 = sphi 0, %s98
    $region4: #{tpu_custom_call.1} parent=1 // loop_header_branch
      %19 = sbr.rel (%p17) target = $region8
    $region5: #{tpu_custom_call.1} parent=1 // loop_body
      %s21 = ssub.s32 %s16, 1
      %s22 = ssub.s32 %s16, 2
      %s23 = sadd.s32 %s16, 1
      %s24 = ssub.s32 %s16, %s23
      %p25 = scmp.eq.s32.totalorder %s24, 0
      %s27 = sadd.s32 %s26, 1
      %s28 = scalar_select %p25, %s26, %s27
      %p31 = pneg %p25
      %p32 = scmp.eq.s32.totalorder %s16, 1
      %p33 = por %p31, %p32
      %p34 = scmp.ne.s32.totalorder %s26, %s29
      %p35 = scmp.eq.s32.totalorder %s16, 0
      %p36 = por %p34, %p35
      %p37 = scmp.ne.s32.totalorder %s26, %s29
      %p38 = scmp.eq.s32.totalorder %s21, 1
      %p39 = por %p37, %p38
      %p40 = scmp.ne.s32.totalorder %s29, %s30
      %p41 = scmp.eq.s32.totalorder %s21, 0
      %p42 = por %p40, %p41
      %p43 = scmp.ne.s32.totalorder %s29, %s30
      %p44 = scmp.eq.s32.totalorder %s22, 1
      %p45 = por %p43, %p44
      %p47 = scmp.ne.s32.totalorder %s30, %s46
      %p48 = scmp.eq.s32.totalorder %s22, 0
      %p49 = por %p47, %p48
      %s51 = sadd.s32 %s50, 1
      %p54 = scmp.eq.s32.totalorder %s16, 1
      %p55 = scmp.ne.s32.totalorder %s50, %s52
      %p56 = scmp.eq.s32.totalorder %s16, 0
      %p57 = por %p55, %p56
      %p58 = scmp.ne.s32.totalorder %s50, %s52
      %p59 = scmp.eq.s32.totalorder %s21, 1
      %p60 = por %p58, %p59
      %p61 = scmp.ne.s32.totalorder %s52, %s53
      %p62 = scmp.eq.s32.totalorder %s21, 0
      %p63 = por %p61, %p62
      %p64 = scmp.ne.s32.totalorder %s52, %s53
      %p65 = scmp.eq.s32.totalorder %s22, 1
      %p66 = por %p64, %p65
      %p68 = scmp.ne.s32.totalorder %s53, %s67
      %p69 = scmp.eq.s32.totalorder %s22, 0
      %p70 = por %p68, %p69
      %s72 = sadd.s32 %s71, 1
      %p75 = scmp.eq.s32.totalorder %s16, 1
      %p76 = scmp.ne.s32.totalorder %s71, %s73
      %p77 = scmp.eq.s32.totalorder %s16, 0
      %p78 = por %p76, %p77
      %p79 = scmp.ne.s32.totalorder %s71, %s73
      %p80 = scmp.eq.s32.totalorder %s21, 1
      %p81 = por %p79, %p80
      %p82 = scmp.ne.s32.totalorder %s73, %s74
      %p83 = scmp.eq.s32.totalorder %s21, 0
      %p84 = por %p82, %p83
      %p85 = scmp.ne.s32.totalorder %s73, %s74
      %p86 = scmp.eq.s32.totalorder %s22, 1
      %p87 = por %p85, %p86
      %p89 = scmp.ne.s32.totalorder %s74, %s88
      %p90 = scmp.eq.s32.totalorder %s22, 0
      %p91 = por %p89, %p90
      %s92 = ssub.s32 %s16, %s23
      %p93 = scmp.eq.s32.totalorder %s92, 0
      %s95 = sadd.s32 %s94, 1
      %s96 = scalar_select %p93, %s94, %s95
      %p99 = pneg %p93
      %p100 = scmp.eq.s32.totalorder %s16, 1
      %p101 = por %p99, %p100
      %p102 = scmp.ne.s32.totalorder %s94, %s97
      %p103 = scmp.eq.s32.totalorder %s16, 0
      %p104 = por %p102, %p103
      %p105 = scmp.ne.s32.totalorder %s94, %s97
      %p106 = scmp.eq.s32.totalorder %s21, 1
      %p107 = por %p105, %p106
      %p108 = scmp.ne.s32.totalorder %s97, %s98
      %p109 = scmp.eq.s32.totalorder %s21, 0
      %p110 = por %p108, %p109
      %p111 = scmp.ne.s32.totalorder %s97, %s98
      %p112 = scmp.eq.s32.totalorder %s22, 1
      %p113 = por %p111, %p112
      %p115 = scmp.ne.s32.totalorder %s98, %s114
      %p116 = scmp.eq.s32.totalorder %s22, 0
      %p117 = por %p115, %p116
      %p118 = scmp.le.s32.totalorder 1, %s16
      %p119 = scmp.lt.s32.totalorder %s16, 3
      %p120 = pnand %p118, %p119
      %p121 = pneg %p120
      // Predicated region
      $region9: #{tpu_custom_call.1} parent=5 // pred_check
        _
      $region10: #{tpu_custom_call.1} parent=5 // pred_check_branch
        %123 = sbr.rel (%p120) target = $region12
      $region11: #{tpu_custom_call.1} parent=5 // pred_region
        %s124 = ssub.s32 %s16, 1
        // Predicated region
        $region13: #{tpu_custom_call.1} parent=11 // pred_check
          %p125 = pneg %p63
        $region14: #{tpu_custom_call.1} parent=11 // pred_check_branch
          %127 = sbr.rel (%p125) target = $region16
        $region15: #{tpu_custom_call.1} parent=11 // pred_region
          %s129 = ssub.s32 3072, 3072
          %130 = vsyncadd [#allocation6], %s129
          %s131 = sshll.u32 [#allocation5], 4
          %s132 = int_to_ptr.vmem [resolvable:$true] %s131
          %137 = dma.hbm_to_vmem [thread:$0]  %s1, 3072, %s132, [#allocation6], 64, 64, 4
        $region16: #{tpu_custom_call.1} parent=11 // pred_fallthru
          _
        // Predicated region
        $region17: #{tpu_custom_call.1} parent=11 // pred_check
          %p138 = pneg %p84
        $region18: #{tpu_custom_call.1} parent=11 // pred_check_branch
          %140 = sbr.rel (%p138) target = $region20
        $region19: #{tpu_custom_call.1} parent=11 // pred_region
          _
        $region20: #{tpu_custom_call.1} parent=11 // pred_fallthru
          _
      $region12: #{tpu_custom_call.1} parent=5 // pred_fallthru
        _
      %p141 = scmp.lt.s32.totalorder %s16, 2
      // Predicated region
      $region21: #{tpu_custom_call.1} parent=5 // pred_check
        %p142 = pneg %p141
      $region22: #{tpu_custom_call.1} parent=5 // pred_check_branch
        %144 = sbr.rel (%p142) target = $region24
      $region23: #{tpu_custom_call.1} parent=5 // pred_region
        // Predicated region
        $region25: #{tpu_custom_call.1} parent=23 // pred_check
          %p145 = pneg %p36
        $region26: #{tpu_custom_call.1} parent=23 // pred_check_branch
          %147 = sbr.rel (%p145) target = $region28
        $region27: #{tpu_custom_call.1} parent=23 // pred_region
          %s148 = sand.u32 %s26, 1
          %s149 = scalar_lea.sflag [#allocation3], %s148
          %s150 = sand.u32 %s26, 1
          %s151 = smul.addr %s150, 16
          %s152 = scalar_lea.vmem [#allocation2], %s151
          %s154 = ssub.s32 256, 256
          %155 = vsyncadd %s149, %s154
          %s156 = smul.addr %s16, 4
          %s157 = smul.addr %s156, 64
          %s158 = scalar_lea.hbm %s0, %s157
          %s159 = sshll.u32 %s152, 4
          %s160 = int_to_ptr.vmem [resolvable:$true] %s159
          %165 = dma.hbm_to_vmem [thread:$0]  %s158, 256, %s160, %s149, 64, 64, 4
        $region28: #{tpu_custom_call.1} parent=23 // pred_fallthru
          _
      $region24: #{tpu_custom_call.1} parent=5 // pred_fallthru
        _
      %p166 = scmp.le.s32.totalorder 1, %s16
      %p167 = scmp.lt.s32.totalorder %s16, 3
      %p168 = pnand %p166, %p167
      %p169 = pneg %p168
      // Predicated region
      $region29: #{tpu_custom_call.1} parent=5 // pred_check
        _
      $region30: #{tpu_custom_call.1} parent=5 // pred_check_branch
        %171 = sbr.rel (%p168) target = $region32
      $region31: #{tpu_custom_call.1} parent=5 // pred_region
        %s172 = ssub.s32 %s16, 1
        %s173 = sand.u32 %s29, 1
        %s174 = scalar_lea.sflag [#allocation3], %s173
        %s175 = sand.u32 %s29, 1
        %s176 = smul.addr %s175, 16
        %s177 = scalar_lea.vmem [#allocation2], %s176
        // Predicated region
        $region33: #{tpu_custom_call.1} parent=31 // pred_check
          %p178 = pneg %p42
        $region34: #{tpu_custom_call.1} parent=31 // pred_check_branch
          %180 = sbr.rel (%p178) target = $region36
        $region35: #{tpu_custom_call.1} parent=31 // pred_region
          %181 = dma.done %s174, 256
        $region36: #{tpu_custom_call.1} parent=31 // pred_fallthru
          _
        // Predicated region
        $region37: #{tpu_custom_call.1} parent=31 // pred_check
          %p182 = pneg %p63
        $region38: #{tpu_custom_call.1} parent=31 // pred_check_branch
          %184 = sbr.rel (%p182) target = $region40
        $region39: #{tpu_custom_call.1} parent=31 // pred_region
          %185 = dma.done [#allocation6], 3072
        $region40: #{tpu_custom_call.1} parent=31 // pred_fallthru
          _
        %s186 = sand.u32 %s29, 1
        %s187 = scalar_lea.sflag [#allocation3], %s186
        %s188 = sand.u32 %s29, 1
        %s189 = smul.addr %s188, 16
        %s190 = scalar_lea.vmem [#allocation2], %s189
        %p191 = pneg %p42
        %p192 = pneg %p39
        %p193 = pneg %p63
        %p194 = pneg %p60
        %p195 = pneg %p84
        %p196 = pneg %p81
        %p197 = pneg %p110
        %p198 = pneg %p107
        %s199 = sand.u32 %s97, 1
        %s200 = scalar_lea.sflag [#allocation4], %s199
        %s201 = sand.u32 %s97, 1
        %s202 = smul.addr %s201, 16
        %s203 = scalar_lea.vmem [#allocation7], %s202
        %v205 = vld [vmem:[%s177] sm:$0xf]
        %v206 = vld [vmem:[%s177 + $0x4] sm:$0xf]
        %v207 = vld [vmem:[%s177 + $0x8] sm:$0x1]
        %v208 = vld [vmem:[%s177] sm:$0xe]
        %v211 = vunpack.c.l.b16 %v205
        %v212 = vunpack.c.l.b16 %v206
        %v213 = vpack.c.b16 %v212, %v211
        %v216 = vunpack.c.l.b16 %v207
        %v217 = vpack.c.b16 %v216, %v216
        %vm218 = vsmask.f32 7424
        %v220 = vshrl.u32 %v213, 16
        %v222 = vshll.u32 %v213, 16
        %v224 = vrot.slane %v222, 1
        %v225 = vor.u32 %v220, %v224
        %v227 = vshll.u32 %v217, 16
        %v229 = vrot.slane %v227, 1
        %v230 = vsel %vm218, %v225, %v229
        %v233 = vunpack.c.l.b16 %v208
        %v234 = vpack.c.b16 %v212, %v233
        %vm235 = vcmask 1046528
        %v236 = vrot.slane %v234, 1
        %v237 = vrot.slane %v217, 1
        %v238 = vsel %vm235, %v236, %v237
        %v240 = vld [vmem:[#allocation5] sm:$0xf]
        %v241 = vld [vmem:[#allocation5 + $0x4] sm:$0xf]
        %v242 = vld [vmem:[#allocation5 + $0x8] sm:$0xf]
        %v243 = vld [vmem:[#allocation5 + $0xc] sm:$0xf]
        %v244 = vld [vmem:[#allocation5 + $0x10] sm:$0xf]
        %v245 = vld [vmem:[#allocation5 + $0x14] sm:$0xf]
        %v246 = vld [vmem:[#allocation5 + $0x18] sm:$0xf]
        %v247 = vld [vmem:[#allocation5 + $0x1c] sm:$0xf]
        %v248 = vld [vmem:[#allocation5 + $0x20] sm:$0xf]
        %v249 = vld [vmem:[#allocation5 + $0x24] sm:$0xf]
        %v250 = vld [vmem:[#allocation5 + $0x28] sm:$0xf]
        %v251 = vld [vmem:[#allocation5 + $0x2c] sm:$0xf]
        %v252 = vld [vmem:[#allocation5 + $0x30] sm:$0xf]
        %v253 = vld [vmem:[#allocation5 + $0x34] sm:$0xf]
        %v254 = vld [vmem:[#allocation5 + $0x38] sm:$0xf]
        %v255 = vld [vmem:[#allocation5 + $0x3c] sm:$0xf]
        %v256 = vld [vmem:[#allocation5 + $0x40] sm:$0xf]
        %v257 = vld [vmem:[#allocation5 + $0x44] sm:$0xf]
        %v258 = vld [vmem:[#allocation5 + $0x48] sm:$0xf]
        %v259 = vld [vmem:[#allocation5 + $0x4c] sm:$0xf]
        %v260 = vld [vmem:[#allocation5 + $0x50] sm:$0xf]
        %v261 = vld [vmem:[#allocation5 + $0x54] sm:$0xf]
        %v262 = vld [vmem:[#allocation5 + $0x58] sm:$0xf]
        %v263 = vld [vmem:[#allocation5 + $0x5c] sm:$0xf]
        %v264 = vld [vmem:[#allocation5 + $0x60] sm:$0xf]
        %v265 = vld [vmem:[#allocation5 + $0x64] sm:$0xf]
        %v266 = vld [vmem:[#allocation5 + $0x68] sm:$0xf]
        %v267 = vld [vmem:[#allocation5 + $0x6c] sm:$0xf]
        %v268 = vld [vmem:[#allocation5 + $0x70] sm:$0xf]
        %v269 = vld [vmem:[#allocation5 + $0x74] sm:$0xf]
        %v270 = vld [vmem:[#allocation5 + $0x78] sm:$0xf]
        %v271 = vld [vmem:[#allocation5 + $0x7c] sm:$0xf]
        %v272 = vld [vmem:[#allocation5 + $0x80] sm:$0xf]
        %v273 = vld [vmem:[#allocation5 + $0x84] sm:$0xf]
        %v274 = vld [vmem:[#allocation5 + $0x88] sm:$0xf]
        %v275 = vld [vmem:[#allocation5 + $0x8c] sm:$0xf]
        %v276 = vld [vmem:[#allocation5 + $0x90] sm:$0xf]
        %v277 = vld [vmem:[#allocation5 + $0x94] sm:$0xf]
        %v278 = vld [vmem:[#allocation5 + $0x98] sm:$0xf]
        %v279 = vld [vmem:[#allocation5 + $0x9c] sm:$0xf]
        %v280 = vld [vmem:[#allocation5 + $0xa0] sm:$0xf]
        %v281 = vld [vmem:[#allocation5 + $0xa4] sm:$0xf]
        %v282 = vld [vmem:[#allocation5 + $0xa8] sm:$0xf]
        %v283 = vld [vmem:[#allocation5 + $0xac] sm:$0xf]
        %v284 = vld [vmem:[#allocation5 + $0xb0] sm:$0xf]
        %v285 = vld [vmem:[#allocation5 + $0xb4] sm:$0xf]
        %v286 = vld [vmem:[#allocation5 + $0xb8] sm:$0xf]
        %v287 = vld [vmem:[#allocation5 + $0xbc] sm:$0xf]
        %v336 = vunpack.c.l.b16 %v240
        %v337 = vunpack.c.l.b16 %v241
        %v338 = vunpack.c.l.b16 %v242
        %v339 = vunpack.c.l.b16 %v243
        %v340 = vunpack.c.l.b16 %v244
        %v341 = vunpack.c.l.b16 %v245
        %v342 = vunpack.c.l.b16 %v246
        %v343 = vunpack.c.l.b16 %v247
        %v344 = vunpack.c.l.b16 %v248
        %v345 = vunpack.c.l.b16 %v249
        %v346 = vunpack.c.l.b16 %v250
        %v347 = vunpack.c.l.b16 %v251
        %v348 = vunpack.c.l.b16 %v252
        %v349 = vunpack.c.l.b16 %v253
        %v350 = vunpack.c.l.b16 %v254
        %v351 = vunpack.c.l.b16 %v255
        %v352 = vunpack.c.l.b16 %v256
        %v353 = vunpack.c.l.b16 %v257
        %v354 = vunpack.c.l.b16 %v258
        %v355 = vunpack.c.l.b16 %v259
        %v356 = vunpack.c.l.b16 %v260
        %v357 = vunpack.c.l.b16 %v261
        %v358 = vunpack.c.l.b16 %v262
        %v359 = vunpack.c.l.b16 %v263
        %v360 = vunpack.c.l.b16 %v264
        %v361 = vunpack.c.l.b16 %v265
        %v362 = vunpack.c.l.b16 %v266
        %v363 = vunpack.c.l.b16 %v267
        %v364 = vunpack.c.l.b16 %v268
        %v365 = vunpack.c.l.b16 %v269
        %v366 = vunpack.c.l.b16 %v270
        %v367 = vunpack.c.l.b16 %v271
        %v368 = vunpack.c.l.b16 %v272
        %v369 = vunpack.c.l.b16 %v273
        %v370 = vunpack.c.l.b16 %v274
        %v371 = vunpack.c.l.b16 %v275
        %v372 = vunpack.c.l.b16 %v276
        %v373 = vunpack.c.l.b16 %v277
        %v374 = vunpack.c.l.b16 %v278
        %v375 = vunpack.c.l.b16 %v279
        %v376 = vunpack.c.l.b16 %v280
        %v377 = vunpack.c.l.b16 %v281
        %v378 = vunpack.c.l.b16 %v282
        %v379 = vunpack.c.l.b16 %v283
        %v380 = vunpack.c.l.b16 %v284
        %v381 = vunpack.c.l.b16 %v285
        %v382 = vunpack.c.l.b16 %v286
        %v383 = vunpack.c.l.b16 %v287
        %v384 = vpack.c.b16 %v337, %v336
        %v385 = vpack.c.b16 %v339, %v338
        %v386 = vpack.c.b16 %v341, %v340
        %v387 = vpack.c.b16 %v343, %v342
        %v388 = vpack.c.b16 %v345, %v344
        %v389 = vpack.c.b16 %v347, %v346
        %v390 = vpack.c.b16 %v349, %v348
        %v391 = vpack.c.b16 %v351, %v350
        %v392 = vpack.c.b16 %v353, %v352
        %v393 = vpack.c.b16 %v355, %v354
        %v394 = vpack.c.b16 %v357, %v356
        %v395 = vpack.c.b16 %v359, %v358
        %v396 = vpack.c.b16 %v361, %v360
        %v397 = vpack.c.b16 %v363, %v362
        %v398 = vpack.c.b16 %v365, %v364
        %v399 = vpack.c.b16 %v367, %v366
        %v400 = vpack.c.b16 %v369, %v368
        %v401 = vpack.c.b16 %v371, %v370
        %v402 = vpack.c.b16 %v373, %v372
        %v403 = vpack.c.b16 %v375, %v374
        %v404 = vpack.c.b16 %v377, %v376
        %v405 = vpack.c.b16 %v379, %v378
        %v406 = vpack.c.b16 %v381, %v380
        %v407 = vpack.c.b16 %v383, %v382
        %432 = vmatprep.subr.bf16.mxu0 0
        %433 = vmatpush1.bf16.msra.mxu0 %v384
        %434 = vmatprep.subr.bf16.mxu0 0
        %435 = vmatpush1.bf16.msra.mxu0 %v385
        %436 = vmatprep.subr.bf16.mxu0 0
        %437 = vmatpush1.bf16.msra.mxu0 %v386
        %438 = vmatprep.subr.bf16.mxu0 0
        %439 = vmatpush1.bf16.msra.mxu0 %v387
        %440 = vmatprep.subr.bf16.mxu0 0
        %441 = vmatpush1.bf16.msra.mxu0 %v388
        %442 = vmatprep.subr.bf16.mxu0 0
        %443 = vmatpush1.bf16.msra.mxu0 %v389
        %444 = vmatprep.subr.bf16.mxu0 0
        %445 = vmatpush1.bf16.msra.mxu0 %v390
        %446 = vmatprep.subr.bf16.mxu0 0
        %447 = vmatpush1.bf16.msra.mxu0 %v391
        %448 = vmatprep.subr.bf16.mxu0 0
        %449 = vmatpush1.bf16.msra.mxu0 %v392
        %450 = vmatprep.subr.bf16.mxu0 0
        %451 = vmatpush1.bf16.msra.mxu0 %v393
        %452 = vmatprep.subr.bf16.mxu0 0
        %453 = vmatpush1.bf16.msra.mxu0 %v394
        %454 = vmatprep.subr.bf16.mxu0 0
        %455 = vmatpush1.bf16.msra.mxu0 %v395
        %456 = vmatprep.subr.bf16.mxu0 0
        %457 = vmatpush1.bf16.msra.mxu0 %v396
        %458 = vmatprep.subr.bf16.mxu0 0
        %459 = vmatpush1.bf16.msra.mxu0 %v397
        %460 = vmatprep.subr.bf16.mxu0 0
        %461 = vmatpush1.bf16.msra.mxu0 %v398
        %462 = vmatprep.subr.bf16.mxu0 0
        %463 = vmatpush1.bf16.msra.mxu0 %v399
        %464 = vmatprep.mubr.bf16.mxu0 %v230
        %465 = vmatmul.mubr.bf16.gmra.mrb[0].mxu0 %v213
        %v466 = vpop.f32.mrb[0].mxu0
        %v467 = vadd.f32 0.0, %v466
        %v468 = vpop.f32.mrb[0].mxu0
        %v469 = vpop.f32.mrb[0].mxu0
        %v470 = vadd.f32 0.0, %v469
        %v471 = vpop.f32.mrb[0].mxu0
        %472 = vdwg.mxu0
        %473 = vmatprep.subr.bf16.mxu0 0
        %474 = vmatpush1.bf16.msra.mxu0 %v400
        %475 = vmatprep.subr.bf16.mxu0 0
        %476 = vmatpush1.bf16.msra.mxu0 %v401
        %477 = vmatprep.subr.bf16.mxu0 0
        %478 = vmatpush1.bf16.msra.mxu0 %v402
        %479 = vmatprep.subr.bf16.mxu0 0
        %480 = vmatpush1.bf16.msra.mxu0 %v403
        %481 = vmatprep.subr.bf16.mxu0 0
        %482 = vmatpush1.bf16.msra.mxu0 %v404
        %483 = vmatprep.subr.bf16.mxu0 0
        %484 = vmatpush1.bf16.msra.mxu0 %v405
        %485 = vmatprep.subr.bf16.mxu0 0
        %486 = vmatpush1.bf16.msra.mxu0 %v406
        %487 = vmatprep.subr.bf16.mxu0 0
        %488 = vmatpush1.bf16.msra.mxu0 %v407
        %489 = vmatprep.subr.bf16.mxu0 0
        %490 = vmatpush1.bf16.msra.mxu0 0
        %491 = vmatprep.subr.bf16.mxu0 0
        %492 = vmatpush1.bf16.msra.mxu0 0
        %493 = vmatprep.subr.bf16.mxu0 0
        %494 = vmatpush1.bf16.msra.mxu0 0
        %495 = vmatprep.subr.bf16.mxu0 0
        %496 = vmatpush1.bf16.msra.mxu0 0
        %497 = vmatprep.subr.bf16.mxu0 0
        %498 = vmatpush1.bf16.msra.mxu0 0
        %499 = vmatprep.subr.bf16.mxu0 0
        %500 = vmatpush1.bf16.msra.mxu0 0
        %501 = vmatprep.subr.bf16.mxu0 0
        %502 = vmatpush1.bf16.msra.mxu0 0
        %503 = vmatprep.subr.bf16.mxu0 0
        %504 = vmatpush1.bf16.msra.mxu0 0
        %505 = vmatprep.mubr.bf16.mxu0 0
        %506 = vmatmul.mubr.bf16.gmra.mrb[0].mxu0 %v238
        %v507 = vpop.f32.mrb[0].mxu0
        %v508 = vadd.f32 %v467, %v507
        %v509 = vpop.f32.mrb[0].mxu0
        %v510 = vpop.f32.mrb[0].mxu0
        %v511 = vadd.f32 %v470, %v510
        %v512 = vpop.f32.mrb[0].mxu0
        %513 = vdwg.mxu0
        %v514 = vld [vmem:[%s2] sm:$0x1]
        %v515 = vlaneseq
        %v516 = vshrl.u32 %v515, 7
        %v517 = vsub.s32 0, %v516
        %v518 = vrot.slane %v514, %v517
        %v519 = vmul.f32 %v508, %v518
        %v520 = vmul.f32 %v511, %v518
        %v521 = vld [vmem:[%s2 + $0x1] sm:$0x1]
        %v522 = vlaneseq
        %v523 = vshrl.u32 %v522, 7
        %v524 = vsub.s32 0, %v523
        %v525 = vrot.slane %v521, %v524
        %v526 = vadd.f32 %v519, %v525
        %v527 = vadd.f32 %v520, %v525
        %v528 = vmul.f32 %v526, 0.1
        %v529 = vmul.f32 %v527, 0.1
        %v530 = vmax.f32 %v526, %v528
        %v531 = vmax.f32 %v527, %v529
        %532 = vst [vmem:[%s203] sm:$0xff] %v530
        %533 = vst [vmem:[%s203 + $0x8] sm:$0xff] %v531
        %s534 = sand.u32 %s97, 1
        %s535 = scalar_lea.sflag [#allocation4], %s534
        %s536 = sand.u32 %s97, 1
        %s537 = smul.addr %s536, 16
        %s538 = scalar_lea.vmem [#allocation7], %s537
        // Predicated region
        $region41: #{tpu_custom_call.1} parent=31 // pred_check
          %p539 = pneg %p107
        $region42: #{tpu_custom_call.1} parent=31 // pred_check_branch
          %541 = sbr.rel (%p539) target = $region44
        $region43: #{tpu_custom_call.1} parent=31 // pred_region
          %s543 = ssub.s32 256, 256
          %544 = vsyncadd %s535, %s543
          %s545 = smul.addr %s21, 2
          %s546 = smul.addr %s545, 128
          %s547 = scalar_lea.hbm %s3, %s546
          %s548 = sshll.u32 %s538, 4
          %s549 = int_to_ptr.vmem [resolvable:$true] %s548
          %554 = dma.vmem_to_hbm [thread:$0]  %s549, 256, %s547, %s535, 128, 128, 8
        $region44: #{tpu_custom_call.1} parent=31 // pred_fallthru
          _
      $region32: #{tpu_custom_call.1} parent=5 // pred_fallthru
        _
      %p555 = scmp.le.s32.totalorder 2, %s16
      // Predicated region
      $region45: #{tpu_custom_call.1} parent=5 // pred_check
        %p556 = pneg %p555
      $region46: #{tpu_custom_call.1} parent=5 // pred_check_branch
        %558 = sbr.rel (%p556) target = $region48
      $region47: #{tpu_custom_call.1} parent=5 // pred_region
        %s559 = ssub.s32 %s16, 2
        // Predicated region
        $region49: #{tpu_custom_call.1} parent=47 // pred_check
          %p560 = pneg %p113
        $region50: #{tpu_custom_call.1} parent=47 // pred_check_branch
          %562 = sbr.rel (%p560) target = $region52
        $region51: #{tpu_custom_call.1} parent=47 // pred_region
          %s563 = sand.u32 %s98, 1
          %s564 = scalar_lea.sflag [#allocation4], %s563
          %s565 = sand.u32 %s98, 1
          %s566 = smul.addr %s565, 16
          %s567 = scalar_lea.vmem [#allocation7], %s566
          %568 = dma.done %s564, 256
        $region52: #{tpu_custom_call.1} parent=47 // pred_fallthru
          _
      $region48: #{tpu_custom_call.1} parent=5 // pred_fallthru
        _
    $region6: #{tpu_custom_call.1} parent=1 // loop_footer
      %s20 = sadd.s32 1, %s16
    $region7: #{tpu_custom_call.1} parent=1 // loop_footer_branch
      %15 = sbr.rel target = $region3
    $region8: #{tpu_custom_call.1} parent=1 // loop_exit
      _
    %569 = vsyncpa [#allocation3], 1
    %s570 = scalar_lea.sflag [#allocation3], 1
    %571 = vsyncpa %s570, 1
    %572 = vsyncpa [#allocation6], 1
    %573 = vsyncpa [#allocation4], 1
    %s574 = scalar_lea.sflag [#allocation4], 1
    %575 = vsyncpa %s574, 1

</llo_original>
